<compile_context>
chip_gen: v6e
topology: v6e:2x2x1
jax: 0.10.0
libtpu: 0.0.40
codegen_flags: <defaults>
</compile_context>

<pallas_src>
import numpy as np
import jax
import jax.numpy as jnp
from jax import lax
from jax.experimental import pallas as pl
from jax.experimental.pallas import tpu as pltpu


def heads_kernel(lhs_ref, w_ref, b_ref, out_ref):
    # lhs_ref: (tS, H) bf16, w_ref: (3, H) bf16, b_ref: (3, 1) f32, out_ref: (3, tS) f32.
    # NT contraction over H -> (3, tS): already lane-dense, no transpose of the big tile.
    logits = lax.dot_general(
        w_ref[...], lhs_ref[...],
        dimension_numbers=(((1,), (1,)), ((), ())),
        preferred_element_type=jnp.float32)                      # (3, tS) f32
    out_ref[...] = logits + b_ref[...]                           # bias (3, 1) broadcast


def _choose_token_tile(n_tok, H, itemsize, vmem_input_budget=24 << 20):
    """Largest 128-multiple token tile whose double-buffered lhs block fits a
    conservative input budget (safe for v7x/v5e scoped VMEM), then shrunk (never
    below 128) until the grid has >=2 steps so v7x's two TensorCores both get work."""
    tS = 128
    for cand in (8192, 4096, 2048, 1024, 512, 256, 128):
        if 2 * cand * H * itemsize <= vmem_input_budget:
            tS = cand
            break
    while tS > 128 and -(-n_tok // tS) < 2:
        tS //= 2
    return tS


def node_edge_heads(lhs, w3h, b3, tS):
    """lhs: (N, H) bf16 flattened tokens (N % tS == 0), w3h: (3, H) bf16,
    b3: (3, 1) f32 -> (3, N) f32 logits."""
    N, H = lhs.shape
    assert N % tS == 0
    grid = (N // tS,)

    # Explicit VMEM limit: double-buffered input + double-buffered output + weights,
    # plus headroom; floored at 16 MiB (v5e scoped default) and capped at 48 MiB so it
    # stays inside v7x's 64 MiB physical VMEM.
    vmem_need = (2 * tS * H * lhs.dtype.itemsize   # lhs double buffer
                 + 2 * 3 * tS * 4                  # out double buffer
                 + 3 * H * 2 + 3 * 4 + 1024)       # resident weights / bias
    vmem_limit = int(min(max(vmem_need + (4 << 20), 16 << 20), 48 << 20))

    cost = pl.CostEstimate(
        flops=2 * N * H * 3,
        transcendentals=0,
        bytes_accessed=(N * H * lhs.dtype.itemsize
                        + 3 * H * w3h.dtype.itemsize
                        + 3 * 4
                        + 3 * N * 4),
    )
    return pl.pallas_call(
        heads_kernel,
        out_shape=jax.ShapeDtypeStruct((3, N), jnp.float32),
        grid_spec=pltpu.PrefetchScalarGridSpec(
            num_scalar_prefetch=0,
            grid=grid,
            in_specs=[
                pl.BlockSpec((tS, H), lambda i: (i, 0)),
                pl.BlockSpec((3, H), lambda i: (0, 0)),
                pl.BlockSpec((3, 1), lambda i: (0, 0)),
            ],
            out_specs=pl.BlockSpec((3, tS), lambda i: (0, i)),
        ),
        compiler_params=pltpu.CompilerParams(
            dimension_semantics=("parallel",),
            vmem_limit_bytes=vmem_limit,
        ),
        cost_estimate=cost,
    )(lhs, w3h, b3)


def node_edge_detector_forward(x, emb_table, w_heads, b_heads, clip_len=True):
    """Mirrors NodeEdgeDetector.forward.

    x: (B, S) int32 token ids.
    w_heads: (H, 3) f32 stacked [nodestart, nodeend, edgespan] weights.
    b_heads: (1, 3) f32 stacked biases.
    Returns logits (B, 3, maxlen) float32.
    """
    B, S_full = x.shape
    H = emb_table.shape[1]
    mask = (x != 0).astype(jnp.int32)

    maxlen = S_full
    if clip_len:
        # maxlen = mask.sum(1).max().item(); maxlen = min(S, maxlen + 1)  (host sync)
        maxlen = int(jnp.max(jnp.sum(mask, axis=1)))
        maxlen = min(S_full, maxlen + 1)
        x = x[:, :maxlen]

    # Collapse batch*sequence into one token axis, pick the tile, then pad the token
    # count up to a multiple of the tile (wastes at most one tile of DMA).
    n_tok = B * maxlen
    tS = _choose_token_tile(n_tok, H, 2)                          # bf16 activations
    n_pad = -(-n_tok // tS) * tS

    x_flat = x.reshape(n_tok)
    if n_pad > n_tok:
        x_flat = jnp.concatenate(
            [x_flat, jnp.zeros((n_pad - n_tok,), dtype=x_flat.dtype)])

    # Synthetic deterministic stand-in for self.bert(...).last_hidden_state, gathered
    # directly in bf16 so the dominant tensor is never materialized in f32.
    # TODO(synk): real path would take the external BERT encoder's activations here.
    lhs_flat = emb_table.astype(jnp.bfloat16)[x_flat]             # (n_pad, H) bf16

    # Dropout output `a` is unused by the returned logits in the original forward.

    # Pre-transpose the tiny head weights so the kernel emits (3, tokens) directly.
    w3h = jnp.asarray(w_heads).T.astype(jnp.bfloat16)             # (3, H)
    b3 = jnp.asarray(b_heads).reshape(3, 1).astype(jnp.float32)   # (3, 1)

    logits_flat = node_edge_heads(lhs_flat, w3h, b3, tS)          # (3, n_pad) f32
    logits = logits_flat[:, :n_tok].reshape(3, B, maxlen)         # tiny f32 fixup
    return jnp.transpose(logits, (1, 0, 2))                       # (B, 3, maxlen)


if __name__ == "__main__":
    B, S, H, VOCAB = 2, 8, 32, 50

    key = jax.random.PRNGKey(0)
    k_x, k_emb, k_ws, k_we, k_es, k_b = jax.random.split(key, 6)

    # Token ids with trailing zeros (padding) so clip_len actually clips.
    x = jax.random.randint(k_x, (B, S), minval=1, maxval=VOCAB, dtype=jnp.int32)
    x = x.at[0, 6:].set(0)
    x = x.at[1, 5:].set(0)

    # Deterministic parameters.
    emb_table = jax.random.normal(k_emb, (VOCAB, H), dtype=jnp.float32) * 0.1

    # PyTorch Linear(dim, 1): weight (1, H), bias (1). Stack the three heads as
    # columns of a (H, 3) matrix in order [nodestart, nodeend, edgespan].
    w_ns = jax.random.normal(k_ws, (H,), dtype=jnp.float32) * 0.05
    w_ne = jax.random.normal(k_we, (H,), dtype=jnp.float32) * 0.05
    w_es = jax.random.normal(k_es, (H,), dtype=jnp.float32) * 0.05
    w_heads = jnp.stack([w_ns, w_ne, w_es], axis=1)               # (H, 3)
    b_heads = (jax.random.normal(k_b, (3,), dtype=jnp.float32) * 0.01).reshape(1, 3)

    logits = node_edge_detector_forward(x, emb_table, w_heads, b_heads, clip_len=True)
    logits = jax.block_until_ready(logits)

    # Reference check in plain JAX (same math & bf16 input cast, f32 accumulation).
    mask = (x != 0).astype(jnp.int32)
    maxlen = min(x.shape[1], int(jnp.max(jnp.sum(mask, axis=1))) + 1)
    lhs_ref = emb_table.astype(jnp.bfloat16)[x[:, :maxlen]].astype(jnp.float32)
    w_ref = w_heads.astype(jnp.bfloat16).astype(jnp.float32)
    ref = jnp.einsum("bsh,hj->bjs", lhs_ref, w_ref) + b_heads.reshape(1, 3, 1)

    np.testing.assert_allclose(np.asarray(logits), np.asarray(ref), rtol=1e-3, atol=1e-3)
    assert logits.shape == (B, 3, maxlen)

    print("KERNEL_OK")
</pallas_src>

<mosaic_0001>
module attributes {stable_mosaic.version = 11 : i64} {
  func.func @heads_kernel(%arg0: i32, %arg1: memref<128x32xbf16, #tpu.memory_space<vmem>>, %arg2: memref<3x32xbf16, #tpu.memory_space<vmem>>, %arg3: memref<3x1xf32, #tpu.memory_space<vmem>>, %arg4: memref<3x128xf32, #tpu.memory_space<vmem>>) attributes {dimension_semantics = [#tpu.dimension_semantics<parallel>], iteration_bounds = array<i64: 1>, scalar_prefetch = 0 : i64, scratch_operands = 0 : i64, tpu.core_type = #tpu.core_type<tc>, window_params = [{transform_indices = @transform_0, window_bounds = array<i64: 128, 32>}, {pipeline_mode = #tpu.pipeline_mode<synchronous>, transform_indices = @transform_1, window_bounds = array<i64: 3, 32>}, {pipeline_mode = #tpu.pipeline_mode<synchronous>, transform_indices = @transform_2, window_bounds = array<i64: 3, 1>}, {transform_indices = @transform_3, window_bounds = array<i64: 3, 128>}]} {
    %c0 = arith.constant 0 : index
    %c0_0 = arith.constant 0 : index
    %0 = vector.load %arg2[%c0, %c0_0] : memref<3x32xbf16, #tpu.memory_space<vmem>>, vector<3x32xbf16>
    %c0_1 = arith.constant 0 : index
    %c0_2 = arith.constant 0 : index
    %1 = vector.load %arg1[%c0_1, %c0_2] : memref<128x32xbf16, #tpu.memory_space<vmem>>, vector<128x32xbf16>
    %cst = arith.constant dense<0.000000e+00> : vector<3x128xf32>
    %2 = tpu.matmul %0, %1, %cst {dimension_numbers = #tpu.dot_dimension_numbers<[1], [1], [0], [0], [0, 0, 1, 0], [], []>} : vector<3x32xbf16>, vector<128x32xbf16>, vector<3x128xf32> -> vector<3x128xf32>
    %c0_3 = arith.constant 0 : index
    %c0_4 = arith.constant 0 : index
    %3 = vector.load %arg3[%c0_3, %c0_4] : memref<3x1xf32, #tpu.memory_space<vmem>>, vector<3x1xf32>
    %4 = vector.broadcast %3 : vector<3x1xf32> to vector<3x128xf32>
    %5 = arith.addf %2, %4 : vector<3x128xf32>
    %c0_5 = arith.constant 0 : index
    %c0_6 = arith.constant 0 : index
    %6 = vector.load %arg4[%c0_5, %c0_6] : memref<3x128xf32, #tpu.memory_space<vmem>>, vector<3x128xf32>
    tpu.vector_store %arg4[%c0_5, %c0_6], %5 {strides = array<i32>} : memref<3x128xf32, #tpu.memory_space<vmem>>, vector<3x128xf32>,
    return
  }
  func.func @transform_0(%arg0: i32) -> (i32, i32) {
    %c0_i32 = arith.constant 0 : i32
    %c0_i32_0 = arith.constant 0 : i32
    return %arg0, %c0_i32 : i32, i32
  }
  func.func @transform_1(%arg0: i32) -> (i32, i32) {
    %c0_i32 = arith.constant 0 : i32
    %c0_i32_0 = arith.constant 0 : i32
    %c0_i32_1 = arith.constant 0 : i32
    return %c0_i32, %c0_i32_0 : i32, i32
  }
  func.func @transform_2(%arg0: i32) -> (i32, i32) {
    %c0_i32 = arith.constant 0 : i32
    %c0_i32_0 = arith.constant 0 : i32
    %c0_i32_1 = arith.constant 0 : i32
    return %c0_i32, %c0_i32_0 : i32, i32
  }
  func.func @transform_3(%arg0: i32) -> (i32, i32) {
    %c0_i32 = arith.constant 0 : i32
    %c0_i32_0 = arith.constant 0 : i32
    return %c0_i32, %arg0 : i32, i32
  }
}

</mosaic_0001>

<llo_original>
// kernel: tpu_custom_call.1
$region0: #{tpu_custom_call.1}
  #allocation0 [shape = 'u32[]', space=smem, size = 0x4, offset = 0x4, fixed_abs, tag = 'smem constant byte address 0x4 - core index']
  #allocation1 [shape = 'u32[144,128]{1,0:T(1,128)}', space=vmem, size = 0x12000, scoped, tag = 'internal scratch']
  %s0 = inlined_call_operand.vmem [shape: bf16[128,32], index: 0, kind: input, shape index: {}]
  %s1 = inlined_call_operand.vmem [shape: bf16[3,32], index: 1, kind: input, shape index: {}]
  %s2 = inlined_call_operand.vmem [shape: f32[3,1], index: 2, kind: input, shape index: {}]
  %s3 = inlined_call_operand.hbm [shape: f32[3,128], index: 3, kind: output, shape index: {}]
  %s4 = sld [smem:[#allocation0]]
  $region22: #{tpu_custom_call.1} parent=0
    _
  %s6 = ssub.s32 1, %s4
  %s7 = scalar_select 0, %s6, %s4
  $region1: #{tpu_custom_call.1} parent=0
    #allocation2 [shape = 'u8[2048]{0}', space=vmem, size = 0x800, scoped, tag = 'output window, operand 0, single buffered']
    #allocation3 [shape = 's32[1]{0}', space=sflag, size = 0x4, scoped, tag = 'scoped memory for tpu_custom_call.1']
    %8 = vsyncpa [#allocation3], 0
    // Predicated region
    $region2: #{tpu_custom_call.1} parent=1 // pred_check
      _
    $region3: #{tpu_custom_call.1} parent=1 // pred_check_branch
      %10 = sbr.rel (0) target = $region5
    $region4: #{tpu_custom_call.1} parent=1 // pred_region
      _
    $region5: #{tpu_custom_call.1} parent=1 // pred_fallthru
      _
    // Predicated region
    $region6: #{tpu_custom_call.1} parent=1 // pred_check
      _
    $region7: #{tpu_custom_call.1} parent=1 // pred_check_branch
      %12 = sbr.rel (0) target = $region9
    $region8: #{tpu_custom_call.1} parent=1 // pred_region
      _
    $region9: #{tpu_custom_call.1} parent=1 // pred_fallthru
      _
    // Predicated region
    $region10: #{tpu_custom_call.1} parent=1 // pred_check
      _
    $region11: #{tpu_custom_call.1} parent=1 // pred_check_branch
      %14 = sbr.rel (0) target = $region13
    $region12: #{tpu_custom_call.1} parent=1 // pred_region
      _
    $region13: #{tpu_custom_call.1} parent=1 // pred_fallthru
      _
    %v16 = vld [vmem:[%s1] sm:$0x3]
    %v17 = vld [vmem:[%s0] sm:$0xf]
    %v18 = vld [vmem:[%s0 + $0x4] sm:$0xf]
    %v19 = vld [vmem:[%s0 + $0x8] sm:$0xf]
    %v20 = vld [vmem:[%s0 + $0xc] sm:$0xf]
    %v21 = vld [vmem:[%s0 + $0x10] sm:$0xf]
    %v22 = vld [vmem:[%s0 + $0x14] sm:$0xf]
    %v23 = vld [vmem:[%s0 + $0x18] sm:$0xf]
    %v24 = vld [vmem:[%s0 + $0x1c] sm:$0xf]
    %v25 = vld [vmem:[%s0 + $0x20] sm:$0xf]
    %v26 = vld [vmem:[%s0 + $0x24] sm:$0xf]
    %v27 = vld [vmem:[%s0 + $0x28] sm:$0xf]
    %v28 = vld [vmem:[%s0 + $0x2c] sm:$0xf]
    %v29 = vld [vmem:[%s0 + $0x30] sm:$0xf]
    %v30 = vld [vmem:[%s0 + $0x34] sm:$0xf]
    %v31 = vld [vmem:[%s0 + $0x38] sm:$0xf]
    %v32 = vld [vmem:[%s0 + $0x3c] sm:$0xf]
    %v33 = vld [vmem:[%s2] sm:$0x7]
    %35 = vset.pattern.permute.xlu0 0
    %36 = vperm.xlu0 %35, %v33
    %v37 = vpop.permute.xlu0 %36
    %v55 = vunpack.c.l.b16 %v17
    %v56 = vunpack.c.l.b16 %v18
    %v57 = vunpack.c.l.b16 %v19
    %v58 = vunpack.c.l.b16 %v20
    %v59 = vunpack.c.l.b16 %v21
    %v60 = vunpack.c.l.b16 %v22
    %v61 = vunpack.c.l.b16 %v23
    %v62 = vunpack.c.l.b16 %v24
    %v63 = vunpack.c.l.b16 %v25
    %v64 = vunpack.c.l.b16 %v26
    %v65 = vunpack.c.l.b16 %v27
    %v66 = vunpack.c.l.b16 %v28
    %v67 = vunpack.c.l.b16 %v29
    %v68 = vunpack.c.l.b16 %v30
    %v69 = vunpack.c.l.b16 %v31
    %v70 = vunpack.c.l.b16 %v32
    %v71 = vpack.c.b16 %v56, %v55
    %v72 = vpack.c.b16 %v58, %v57
    %v73 = vpack.c.b16 %v60, %v59
    %v74 = vpack.c.b16 %v62, %v61
    %v75 = vpack.c.b16 %v64, %v63
    %v76 = vpack.c.b16 %v66, %v65
    %v77 = vpack.c.b16 %v68, %v67
    %v78 = vpack.c.b16 %v70, %v69
    %vm79 = vcmask 261120
    %v81 = vsel %vm79, %v16, 0
    %v84 = vsel %vm79, %v71, 0
    %v87 = vsel %vm79, %v72, 0
    %v90 = vsel %vm79, %v73, 0
    %v93 = vsel %vm79, %v74, 0
    %v96 = vsel %vm79, %v75, 0
    %v99 = vsel %vm79, %v76, 0
    %v102 = vsel %vm79, %v77, 0
    %v105 = vsel %vm79, %v78, 0
    %107 = vmatprep.subr.bf16.mxu0 0
    %108 = vmatpush1.bf16.xpose.msra.mxu0 %v105
    %109 = vmatprep.subr.bf16.mxu0 0
    %110 = vmatpush1.bf16.xpose.msra.mxu0 %v102
    %111 = vmatprep.subr.bf16.mxu0 0
    %112 = vmatpush1.bf16.xpose.msra.mxu0 %v99
    %113 = vmatprep.subr.bf16.mxu0 0
    %114 = vmatpush1.bf16.xpose.msra.mxu0 %v96
    %115 = vmatprep.subr.bf16.mxu0 0
    %116 = vmatpush1.bf16.xpose.msra.mxu0 %v93
    %117 = vmatprep.subr.bf16.mxu0 0
    %118 = vmatpush1.bf16.xpose.msra.mxu0 %v90
    %119 = vmatprep.subr.bf16.mxu0 0
    %120 = vmatpush1.bf16.xpose.msra.mxu0 %v87
    %121 = vmatprep.subr.bf16.mxu0 0
    %122 = vmatpush1.bf16.xpose.msra.mxu0 %v84
    %123 = vmatprep.subr.bf16.mxu0 0
    %124 = vmatpush2.bf16.xpose.msra.mxu0 0
    %125 = vmatprep.subr.bf16.mxu0 0
    %126 = vmatpush2.bf16.xpose.msra.mxu0 0
    %127 = vmatprep.subr.bf16.mxu0 0
    %128 = vmatpush2.bf16.xpose.msra.mxu0 0
    %129 = vmatprep.subr.bf16.mxu0 0
    %130 = vmatpush2.bf16.xpose.msra.mxu0 0
    %131 = vmatprep.subr.bf16.mxu0 0
    %132 = vmatpush2.bf16.xpose.msra.mxu0 0
    %133 = vmatprep.subr.bf16.mxu0 0
    %134 = vmatpush2.bf16.xpose.msra.mxu0 0
    %135 = vmatprep.subr.bf16.mxu0 0
    %136 = vmatpush2.bf16.xpose.msra.mxu0 0
    %137 = vmatprep.subr.bf16.mxu0 0
    %138 = vmatpush2.bf16.xpose.msra.mxu0 0
    %139 = vmatprep.mubr.bf16.mxu0 0
    %140 = vmatmul.mubr.bf16.gmra.mxu0 %v81
    %v141 = vpop.f32.mrf.mxu0
    %v142 = vadd.f32 %v37, %v141
    %v143 = vpop.f32.mrf.mxu0
    %v144 = vpop.f32.mrf.mxu0
    %v145 = vpop.f32.mrf.mxu0
    %146 = vdwg.mxu0
    %147 = vst [vmem:[#allocation2] sm:$0x7] %v142
    // Predicated region
    $region14: #{tpu_custom_call.1} parent=1 // pred_check
      _
    $region15: #{tpu_custom_call.1} parent=1 // pred_check_branch
      %149 = sbr.rel (0) target = $region17
    $region16: #{tpu_custom_call.1} parent=1 // pred_region
      %s151 = ssub.s32 64, 64
      %152 = vsyncadd [#allocation3], %s151
      %s154 = sshll.u32 [#allocation2], 4
      %s155 = int_to_ptr.vmem [resolvable:$true] %s154
      %157 = dma.vmem_to_hbm [thread:$0]  %s155, 64, %s3, [#allocation3]
    $region17: #{tpu_custom_call.1} parent=1 // pred_fallthru
      _
    // Predicated region
    $region18: #{tpu_custom_call.1} parent=1 // pred_check
      _
    $region19: #{tpu_custom_call.1} parent=1 // pred_check_branch
      %159 = sbr.rel (0) target = $region21
    $region20: #{tpu_custom_call.1} parent=1 // pred_region
      %160 = dma.done [#allocation3], 64
    $region21: #{tpu_custom_call.1} parent=1 // pred_fallthru
      _
    %161 = vsyncpa [#allocation3], 1

</llo_original>
